<compile_context>
chip_gen: v5e
topology: v5e:2x2
jax: 0.10.0
libtpu: 0.0.40
codegen_flags: <defaults>
</compile_context>

<pallas_src>
import numpy as np
import jax
import jax.numpy as jnp
from jax import lax
from jax.experimental import pallas as pl
from jax.experimental.pallas import tpu as pltpu

K = 3        # pool kernel size
S = 2        # pool stride
P = 1        # pool padding
NEG = -1e30  # stands in for -inf padding (finite; never reaches the output)


def _maxpool_sub_relu_kernel(y_ref, csel_ref, o_ref):
    # y_ref   : (Bc, H2, 2W) f32 with y[b, p, r*W + w] = x[b, 2p + r, w], r in {0,1}
    # csel_ref: (W, WO) f32 one-hot, csel[w, ow] = (w == 2*ow)
    # o_ref   : (Bc, HO, WO) f32, HO == H2
    Bc, H2, twoW = y_ref.shape
    W = twoW // 2
    WO = o_ref.shape[-1]
    neg = jnp.float32(NEG)

    # Collapse leading dims into the sublane axis (layout-preserving, free).
    y = y_ref[...].reshape(Bc * H2, twoW)

    # ---- 3-wide column max (lane direction), within each packed row half --
    # XLU lane rotates; wrap-around lanes fixed up with a (1, 2W) edge mask.
    y_lm1 = pltpu.roll(y, 1, 1)             # lane l <- lane l-1 (wraps)
    y_lp1 = pltpu.roll(y, twoW - 1, 1)      # lane l <- lane l+1 (wraps)
    lane = lax.broadcasted_iota(jnp.int32, (1, twoW), 1)
    y_lm1 = jnp.where((lane == 0) | (lane == W), neg, y_lm1)
    y_lp1 = jnp.where((lane == W - 1) | (lane == twoW - 1), neg, y_lp1)
    cm = jnp.maximum(jnp.maximum(y_lm1, y), y_lp1)          # (Bc*H2, 2W)

    # ---- 3-tall row max over input rows {2p-1, 2p, 2p+1} -------------------
    # Even half of cm = col-max of row 2p, odd half = col-max of row 2p+1.
    # Row 2p-1 = odd half of the previous packed row (sublane roll by 1),
    # masked to NEG on the first packed row of every plane.
    cm_up = pltpu.roll(cm, 1, 0)                            # row g <- row g-1
    row = lax.broadcasted_iota(jnp.int32, (Bc * H2, 1), 0)
    od_up = jnp.where(row % H2 == 0, neg, cm_up[:, W:])
    rowmax = jnp.maximum(jnp.maximum(cm[:, :W], cm[:, W:]), od_up)   # (Bc*H2, W)

    # ---- stride-2 column subsample: ONE batched exact one-hot matmul, then
    # -100 and ReLU, and a single coalesced store.
    pooled = jnp.dot(rowmax, csel_ref[...],
                     preferred_element_type=jnp.float32,
                     precision=lax.Precision.HIGHEST)       # (Bc*H2, WO)
    out = jnp.maximum(pooled - 100.0, 0.0)
    o_ref[...] = out.reshape(Bc, H2, WO).astype(o_ref.dtype)


def _block_budget_bytes():
    """Per-input-block budget (BlockSpec double-buffers, so keep headroom)."""
    try:
        kind = jax.devices()[0].device_kind.lower()
    except Exception:
        kind = ""
    if "v7" in kind or "7x" in kind:
        return 2 * 1024 * 1024      # v7x: only 64 MiB physical VMEM
    return 4 * 1024 * 1024          # v5e / v6e: 128 MiB VMEM


def model_forward(x, *, max_block_bytes=None, min_split_block_bytes=256 * 1024):
    """x: (N, C, H, W) float32 -> (N, C, HO, WO) float32."""
    N, C, H, W = x.shape
    assert H % 2 == 0 and W % 2 == 0, "kernel assumes even spatial dims"
    HO = (H + 2 * P - K) // S + 1
    WO = (W + 2 * P - K) // S + 1
    assert HO == H // 2 and WO == W // 2

    NC = N * C
    H2 = H // 2
    if max_block_bytes is None:
        max_block_bytes = _block_budget_bytes()

    # Planes per block: largest divisor of NC under the VMEM budget (big blocks
    # amortize the ~0.35us per-grid-step overhead).  When blocks are already
    # big enough that launch overhead is amortized, keep the grid >= 2 steps so
    # both v7x TensorCores get work (dimension_semantics=("parallel",)).
    plane_bytes = H2 * 2 * W * 4
    divisors = [d for d in range(1, NC + 1) if NC % d == 0]
    bc = max((d for d in divisors if d * plane_bytes <= max_block_bytes), default=1)
    if NC >= 2 and NC // bc < 2:
        split = [d for d in divisors
                 if NC // d >= 2
                 and min_split_block_bytes <= d * plane_bytes <= max_block_bytes]
        if split:
            bc = max(split)
    grid = (NC // bc,)

    # Free, contiguous reshape: pack (even, odd) row pairs into 2W lanes.
    xr = x.astype(jnp.float32).reshape(NC, H2, 2 * W)
    # Host-built one-hot stride-2 column-selection matrix (resident constant).
    csel = jnp.asarray(
        np.equal.outer(np.arange(W), 2 * np.arange(WO)).astype(np.float32))

    out = pl.pallas_call(
        _maxpool_sub_relu_kernel,
        out_shape=jax.ShapeDtypeStruct((NC, HO, WO), jnp.float32),
        grid=grid,
        in_specs=[
            pl.BlockSpec((bc, H2, 2 * W), lambda i: (i, 0, 0)),
            pl.BlockSpec((W, WO), lambda i: (0, 0)),   # constant: DMA'd once
        ],
        out_specs=pl.BlockSpec((bc, HO, WO), lambda i: (i, 0, 0)),
        compiler_params=pltpu.CompilerParams(
            dimension_semantics=("parallel",),
            vmem_limit_bytes=32 * 1024 * 1024),
    )(xr, csel)
    return out.reshape(N, C, HO, WO)


def _reference(x):
    pooled = lax.reduce_window(
        x, -jnp.inf, lax.max,
        window_dimensions=(1, 1, K, K),
        window_strides=(1, 1, S, S),
        padding=((0, 0), (0, 0), (P, P), (P, P)))
    return jnp.maximum(pooled - 100.0, 0.0)


if __name__ == "__main__":
    # Module intent: MaxPool2d(kernel=3, stride=2, padding=1) on (1, 3, 64, 64).
    key = jax.random.PRNGKey(0)
    x1 = jax.random.normal(key, (1, 3, 64, 64), dtype=jnp.float32)

    y = jax.block_until_ready(model_forward(x1))
    y_ref = jax.block_until_ready(_reference(x1))

    assert y.shape == (1, 3, 32, 32), y.shape
    assert np.allclose(np.asarray(y), np.asarray(y_ref), atol=1e-5), "mismatch vs reference"
    print("KERNEL_OK")
</pallas_src>

<mosaic_0001>
module attributes {stable_mosaic.version = 11 : i64} {
  func.func @_maxpool_sub_relu_kernel(%arg0: i32, %arg1: memref<3x32x128xf32, #tpu.memory_space<vmem>>, %arg2: memref<64x32xf32, #tpu.memory_space<vmem>>, %arg3: memref<3x32x32xf32, #tpu.memory_space<vmem>>) attributes {dimension_semantics = [#tpu.dimension_semantics<parallel>], iteration_bounds = array<i64: 1>, scalar_prefetch = 0 : i64, scratch_operands = 0 : i64, tpu.core_type = #tpu.core_type<tc>, window_params = [{transform_indices = @transform_0, window_bounds = array<i64: 3, 32, 128>}, {pipeline_mode = #tpu.pipeline_mode<synchronous>, transform_indices = @transform_1, window_bounds = array<i64: 64, 32>}, {transform_indices = @transform_2, window_bounds = array<i64: 3, 32, 32>}]} {
    %c0 = arith.constant 0 : index
    %c0_0 = arith.constant 0 : index
    %c0_1 = arith.constant 0 : index
    %0 = vector.load %arg1[%c0, %c0_0, %c0_1] : memref<3x32x128xf32, #tpu.memory_space<vmem>>, vector<3x32x128xf32>
    %1 = vector.shape_cast %0 : vector<3x32x128xf32> to vector<96x128xf32>
    %c1_i32 = arith.constant 1 : i32
    %2 = tpu.dynamic_rotate %1 by %c1_i32 dim 1 : vector<96x128xf32>, i32 -> vector<96x128xf32>
    %c127_i32 = arith.constant 127 : i32
    %3 = tpu.dynamic_rotate %1 by %c127_i32 dim 1 : vector<96x128xf32>, i32 -> vector<96x128xf32>
    %4 = tpu.iota {dimensions = array<i32: 1>} : vector<1x128xi32>
    %c0_i32 = arith.constant 0 : i32
    %5 = vector.broadcast %c0_i32 : i32 to vector<1x128xi32>
    %6 = arith.cmpi eq, %4, %5 : vector<1x128xi32>
    %c64_i32 = arith.constant 64 : i32
    %7 = vector.broadcast %c64_i32 : i32 to vector<1x128xi32>
    %8 = arith.cmpi eq, %4, %7 : vector<1x128xi32>
    %9 = arith.ori %6, %8 : vector<1x128xi1>
    %cst = arith.constant -1.000000e+30 : f32
    %10 = vector.shape_cast %9 : vector<1x128xi1> to vector<1x128xi1>
    %11 = vector.broadcast %10 : vector<1x128xi1> to vector<96x128xi1>
    %12 = vector.broadcast %cst : f32 to vector<96x128xf32>
    %13 = arith.select %11, %12, %2 : vector<96x128xi1>, vector<96x128xf32>
    %c63_i32 = arith.constant 63 : i32
    %14 = vector.broadcast %c63_i32 : i32 to vector<1x128xi32>
    %15 = arith.cmpi eq, %4, %14 : vector<1x128xi32>
    %c127_i32_2 = arith.constant 127 : i32
    %16 = vector.broadcast %c127_i32_2 : i32 to vector<1x128xi32>
    %17 = arith.cmpi eq, %4, %16 : vector<1x128xi32>
    %18 = arith.ori %15, %17 : vector<1x128xi1>
    %cst_3 = arith.constant -1.000000e+30 : f32
    %19 = vector.shape_cast %18 : vector<1x128xi1> to vector<1x128xi1>
    %20 = vector.broadcast %19 : vector<1x128xi1> to vector<96x128xi1>
    %21 = vector.broadcast %cst_3 : f32 to vector<96x128xf32>
    %22 = arith.select %20, %21, %3 : vector<96x128xi1>, vector<96x128xf32>
    %23 = arith.maximumf %13, %1 : vector<96x128xf32>
    %24 = arith.maximumf %23, %22 : vector<96x128xf32>
    %c1_i32_4 = arith.constant 1 : i32
    %25 = tpu.dynamic_rotate %24 by %c1_i32_4 dim 0 : vector<96x128xf32>, i32 -> vector<96x128xf32>
    %26 = tpu.iota {dimensions = array<i32: 0>} : vector<96x1xi32>
    %c32_i32 = arith.constant 32 : i32
    %c0_i32_5 = arith.constant 0 : i32
    %27 = arith.cmpi eq, %c32_i32, %c0_i32_5 : i32
    %c1_i32_6 = arith.constant 1 : i32
    %28 = arith.select %27, %c1_i32_6, %c32_i32 : i32
    %29 = vector.broadcast %28 : i32 to vector<96x1xi32>
    %30 = arith.remsi %26, %29 : vector<96x1xi32>
    %c0_i32_7 = arith.constant 0 : i32
    %31 = vector.broadcast %c0_i32_7 : i32 to vector<96x1xi32>
    %32 = arith.cmpi ne, %30, %31 : vector<96x1xi32>
    %c0_i32_8 = arith.constant 0 : i32
    %33 = vector.broadcast %c0_i32_8 : i32 to vector<96x1xi32>
    %34 = arith.cmpi slt, %30, %33 : vector<96x1xi32>
    %c0_i32_9 = arith.constant 0 : i32
    %35 = arith.cmpi slt, %28, %c0_i32_9 : i32
    %36 = vector.broadcast %35 : i1 to vector<96x1xi1>
    %37 = vector.broadcast %36 : vector<96x1xi1> to vector<96x1xi1>
    %38 = arith.xori %34, %37 : vector<96x1xi1>
    %39 = arith.andi %38, %32 : vector<96x1xi1>
    %40 = vector.broadcast %28 : i32 to vector<96x1xi32>
    %41 = arith.addi %30, %40 : vector<96x1xi32>
    %42 = arith.select %39, %41, %30 : vector<96x1xi1>, vector<96x1xi32>
    %c0_i32_10 = arith.constant 0 : i32
    %43 = vector.broadcast %c0_i32_10 : i32 to vector<96x1xi32>
    %44 = arith.cmpi eq, %42, %43 : vector<96x1xi32>
    %45 = vector.extract_strided_slice %25 {offsets = [0, 64], sizes = [96, 64], strides = [1, 1]} : vector<96x128xf32> to vector<96x64xf32>
    %cst_11 = arith.constant -1.000000e+30 : f32
    %46 = vector.shape_cast %44 : vector<96x1xi1> to vector<96x1xi1>
    %47 = vector.broadcast %46 : vector<96x1xi1> to vector<96x64xi1>
    %48 = vector.broadcast %cst_11 : f32 to vector<96x64xf32>
    %49 = arith.select %47, %48, %45 : vector<96x64xi1>, vector<96x64xf32>
    %50 = vector.extract_strided_slice %24 {offsets = [0, 0], sizes = [96, 64], strides = [1, 1]} : vector<96x128xf32> to vector<96x64xf32>
    %51 = vector.extract_strided_slice %24 {offsets = [0, 64], sizes = [96, 64], strides = [1, 1]} : vector<96x128xf32> to vector<96x64xf32>
    %52 = arith.maximumf %50, %51 : vector<96x64xf32>
    %53 = arith.maximumf %52, %49 : vector<96x64xf32>
    %c0_12 = arith.constant 0 : index
    %c0_13 = arith.constant 0 : index
    %54 = vector.load %arg2[%c0_12, %c0_13] : memref<64x32xf32, #tpu.memory_space<vmem>>, vector<64x32xf32>
    %cst_14 = arith.constant dense<0.000000e+00> : vector<96x32xf32>
    %55 = tpu.matmul %53, %54, %cst_14 {dimension_numbers = #tpu.dot_dimension_numbers<[1], [0], [0], [1], [0, 0, 1, 1], [], []>, precision = #tpu.contract_precision<fp32>} : vector<96x64xf32>, vector<64x32xf32>, vector<96x32xf32> -> vector<96x32xf32>
    %cst_15 = arith.constant 1.000000e+02 : f32
    %56 = vector.broadcast %cst_15 : f32 to vector<96x32xf32>
    %57 = arith.subf %55, %56 : vector<96x32xf32>
    %cst_16 = arith.constant 0.000000e+00 : f32
    %58 = vector.broadcast %cst_16 : f32 to vector<96x32xf32>
    %59 = arith.maximumf %57, %58 : vector<96x32xf32>
    %60 = vector.shape_cast %59 : vector<96x32xf32> to vector<3x32x32xf32>
    %c0_17 = arith.constant 0 : index
    %c0_18 = arith.constant 0 : index
    %c0_19 = arith.constant 0 : index
    %61 = vector.load %arg3[%c0_17, %c0_18, %c0_19] : memref<3x32x32xf32, #tpu.memory_space<vmem>>, vector<3x32x32xf32>
    tpu.vector_store %arg3[%c0_17, %c0_18, %c0_19], %60 {strides = array<i32>} : memref<3x32x32xf32, #tpu.memory_space<vmem>>, vector<3x32x32xf32>,
    return
  }
  func.func @transform_0(%arg0: i32) -> (i32, i32, i32) {
    %c0_i32 = arith.constant 0 : i32
    %c0_i32_0 = arith.constant 0 : i32
    %c0_i32_1 = arith.constant 0 : i32
    return %arg0, %c0_i32, %c0_i32_0 : i32, i32, i32
  }
  func.func @transform_1(%arg0: i32) -> (i32, i32) {
    %c0_i32 = arith.constant 0 : i32
    %c0_i32_0 = arith.constant 0 : i32
    %c0_i32_1 = arith.constant 0 : i32
    return %c0_i32, %c0_i32_0 : i32, i32
  }
  func.func @transform_2(%arg0: i32) -> (i32, i32, i32) {
    %c0_i32 = arith.constant 0 : i32
    %c0_i32_0 = arith.constant 0 : i32
    %c0_i32_1 = arith.constant 0 : i32
    return %arg0, %c0_i32, %c0_i32_0 : i32, i32, i32
  }
}

</mosaic_0001>

<llo_original>
// kernel: tpu_custom_call.1
$region0: #{tpu_custom_call.1}
  #allocation0 [shape = 'u32[]', space=smem, size = 0x4, offset = 0x4, fixed_abs, tag = 'smem constant byte address 0x4 - core index']
  #allocation1 [shape = 'u32[72,128]{1,0:T(1,128)}', space=vmem, size = 0x9000, scoped, tag = 'internal scratch']
  %s0 = inlined_call_operand.vmem [shape: f32[3,32,128], index: 0, kind: input, shape index: {}]
  %s1 = inlined_call_operand.vmem [shape: f32[64,32], index: 1, kind: input, shape index: {}]
  %s2 = inlined_call_operand.hbm [shape: f32[3,32,32], index: 2, kind: output, shape index: {}]
  %s3 = sld [smem:[#allocation0]]
  $region18: #{tpu_custom_call.1} parent=0
    _
  %s5 = ssub.s32 1, %s3
  %s6 = scalar_select 0, %s5, %s3
  $region1: #{tpu_custom_call.1} parent=0
    #allocation2 [shape = 'u8[49152]{0}', space=vmem, size = 0xc000, scoped, tag = 'output window, operand 0, single buffered']
    #allocation3 [shape = 's32[1]{0}', space=sflag, size = 0x4, scoped, tag = 'scoped memory for tpu_custom_call.1']
    %7 = vsyncpa [#allocation3], 0
    // Predicated region
    $region2: #{tpu_custom_call.1} parent=1 // pred_check
      _
    $region3: #{tpu_custom_call.1} parent=1 // pred_check_branch
      %9 = sbr.rel (0) target = $region5
    $region4: #{tpu_custom_call.1} parent=1 // pred_region
      _
    $region5: #{tpu_custom_call.1} parent=1 // pred_fallthru
      _
    // Predicated region
    $region6: #{tpu_custom_call.1} parent=1 // pred_check
      _
    $region7: #{tpu_custom_call.1} parent=1 // pred_check_branch
      %11 = sbr.rel (0) target = $region9
    $region8: #{tpu_custom_call.1} parent=1 // pred_region
      _
    $region9: #{tpu_custom_call.1} parent=1 // pred_fallthru
      _
    %v12 = vld [vmem:[%s0] sm:$0xff]
    %v13 = vld [vmem:[%s0 + $0x8] sm:$0xff]
    %v14 = vld [vmem:[%s0 + $0x10] sm:$0xff]
    %v15 = vld [vmem:[%s0 + $0x18] sm:$0xff]
    %v16 = vld [vmem:[%s0 + $0x20] sm:$0xff]
    %v17 = vld [vmem:[%s0 + $0x28] sm:$0xff]
    %v18 = vld [vmem:[%s0 + $0x30] sm:$0xff]
    %v19 = vld [vmem:[%s0 + $0x38] sm:$0xff]
    %v20 = vld [vmem:[%s0 + $0x40] sm:$0xff]
    %v21 = vld [vmem:[%s0 + $0x48] sm:$0xff]
    %v22 = vld [vmem:[%s0 + $0x50] sm:$0xff]
    %v23 = vld [vmem:[%s0 + $0x58] sm:$0xff]
    %24 = vrot.lane.b32.xlu0 %v12, 1
    %v25 = vpop.permute.xlu0 %24
    %26 = vrot.lane.b32.xlu0 %v13, 1
    %v27 = vpop.permute.xlu0 %26
    %28 = vrot.lane.b32.xlu0 %v14, 1
    %v29 = vpop.permute.xlu0 %28
    %30 = vrot.lane.b32.xlu0 %v15, 1
    %v31 = vpop.permute.xlu0 %30
    %32 = vrot.lane.b32.xlu0 %v16, 1
    %v33 = vpop.permute.xlu0 %32
    %34 = vrot.lane.b32.xlu0 %v17, 1
    %v35 = vpop.permute.xlu0 %34
    %36 = vrot.lane.b32.xlu0 %v18, 1
    %v37 = vpop.permute.xlu0 %36
    %38 = vrot.lane.b32.xlu0 %v19, 1
    %v39 = vpop.permute.xlu0 %38
    %40 = vrot.lane.b32.xlu0 %v20, 1
    %v41 = vpop.permute.xlu0 %40
    %42 = vrot.lane.b32.xlu0 %v21, 1
    %v43 = vpop.permute.xlu0 %42
    %44 = vrot.lane.b32.xlu0 %v22, 1
    %v45 = vpop.permute.xlu0 %44
    %46 = vrot.lane.b32.xlu0 %v23, 1
    %v47 = vpop.permute.xlu0 %46
    %48 = vrot.lane.b32.xlu0 %v12, 127
    %v49 = vpop.permute.xlu0 %48
    %50 = vrot.lane.b32.xlu0 %v13, 127
    %v51 = vpop.permute.xlu0 %50
    %52 = vrot.lane.b32.xlu0 %v14, 127
    %v53 = vpop.permute.xlu0 %52
    %54 = vrot.lane.b32.xlu0 %v15, 127
    %v55 = vpop.permute.xlu0 %54
    %56 = vrot.lane.b32.xlu0 %v16, 127
    %v57 = vpop.permute.xlu0 %56
    %58 = vrot.lane.b32.xlu0 %v17, 127
    %v59 = vpop.permute.xlu0 %58
    %60 = vrot.lane.b32.xlu0 %v18, 127
    %v61 = vpop.permute.xlu0 %60
    %62 = vrot.lane.b32.xlu0 %v19, 127
    %v63 = vpop.permute.xlu0 %62
    %64 = vrot.lane.b32.xlu0 %v20, 127
    %v65 = vpop.permute.xlu0 %64
    %66 = vrot.lane.b32.xlu0 %v21, 127
    %v67 = vpop.permute.xlu0 %66
    %68 = vrot.lane.b32.xlu0 %v22, 127
    %v69 = vpop.permute.xlu0 %68
    %70 = vrot.lane.b32.xlu0 %v23, 127
    %v71 = vpop.permute.xlu0 %70
    %v72 = vlaneseq
    %v73 = vand.u32 %v72, 127
    %vm74 = vcmp.eq.s32.totalorder %v73, 0
    %vm75 = vcmp.eq.s32.totalorder %v73, 64
    %vm76 = vmor %vm74, %vm75
    %v77 = vsel %vm76, 1, 0
    %vm78 = vcmp.eq.s32.totalorder %v77, 1
    %v79 = vsel %vm78, -1e+30, %v25
    %v80 = vsel %vm78, -1e+30, %v27
    %v81 = vsel %vm78, -1e+30, %v29
    %v82 = vsel %vm78, -1e+30, %v31
    %v83 = vsel %vm78, -1e+30, %v33
    %v84 = vsel %vm78, -1e+30, %v35
    %v85 = vsel %vm78, -1e+30, %v37
    %v86 = vsel %vm78, -1e+30, %v39
    %v87 = vsel %vm78, -1e+30, %v41
    %v88 = vsel %vm78, -1e+30, %v43
    %v89 = vsel %vm78, -1e+30, %v45
    %v90 = vsel %vm78, -1e+30, %v47
    %vm91 = vcmp.eq.s32.totalorder %v73, 63
    %vm92 = vcmp.eq.s32.totalorder %v73, 127
    %vm93 = vmor %vm91, %vm92
    %v94 = vsel %vm93, 1, 0
    %vm95 = vcmp.eq.s32.totalorder %v94, 1
    %v96 = vsel %vm95, -1e+30, %v49
    %v97 = vsel %vm95, -1e+30, %v51
    %v98 = vsel %vm95, -1e+30, %v53
    %v99 = vsel %vm95, -1e+30, %v55
    %v100 = vsel %vm95, -1e+30, %v57
    %v101 = vsel %vm95, -1e+30, %v59
    %v102 = vsel %vm95, -1e+30, %v61
    %v103 = vsel %vm95, -1e+30, %v63
    %v104 = vsel %vm95, -1e+30, %v65
    %v105 = vsel %vm95, -1e+30, %v67
    %v106 = vsel %vm95, -1e+30, %v69
    %v107 = vsel %vm95, -1e+30, %v71
    %v108 = vmax.f32 %v79, %v12
    %v109 = vmax.f32 %v80, %v13
    %v110 = vmax.f32 %v81, %v14
    %v111 = vmax.f32 %v82, %v15
    %v112 = vmax.f32 %v83, %v16
    %v113 = vmax.f32 %v84, %v17
    %v114 = vmax.f32 %v85, %v18
    %v115 = vmax.f32 %v86, %v19
    %v116 = vmax.f32 %v87, %v20
    %v117 = vmax.f32 %v88, %v21
    %v118 = vmax.f32 %v89, %v22
    %v119 = vmax.f32 %v90, %v23
    %v120 = vmax.f32 %v108, %v96
    %v121 = vmax.f32 %v109, %v97
    %v122 = vmax.f32 %v110, %v98
    %v123 = vmax.f32 %v111, %v99
    %v124 = vmax.f32 %v112, %v100
    %v125 = vmax.f32 %v113, %v101
    %v126 = vmax.f32 %v114, %v102
    %v127 = vmax.f32 %v115, %v103
    %v128 = vmax.f32 %v116, %v104
    %v129 = vmax.f32 %v117, %v105
    %v130 = vmax.f32 %v118, %v106
    %v131 = vmax.f32 %v119, %v107
    %v132 = vrot.slane %v120, 7
    %v133 = vrot.slane %v121, 7
    %v134 = vrot.slane %v122, 7
    %v135 = vrot.slane %v123, 7
    %v136 = vrot.slane %v124, 7
    %v137 = vrot.slane %v125, 7
    %v138 = vrot.slane %v126, 7
    %v139 = vrot.slane %v127, 7
    %v140 = vrot.slane %v128, 7
    %v141 = vrot.slane %v129, 7
    %v142 = vrot.slane %v130, 7
    %v143 = vrot.slane %v131, 7
    %v144 = vlaneseq
    %v145 = vshrl.u32 %v144, 7
    %vm146 = vcmp.lt.s32.totalorder %v145, 1
    %v147 = vsel %vm146, %v142, %v143
    %v148 = vsel %vm146, %v141, %v142
    %v149 = vsel %vm146, %v140, %v141
    %v150 = vsel %vm146, %v139, %v140
    %v151 = vsel %vm146, %v138, %v139
    %v152 = vsel %vm146, %v137, %v138
    %v153 = vsel %vm146, %v136, %v137
    %v154 = vsel %vm146, %v135, %v136
    %v155 = vsel %vm146, %v134, %v135
    %v156 = vsel %vm146, %v133, %v134
    %v157 = vsel %vm146, %v132, %v133
    %v158 = vsel %vm146, %v143, %v132
    %v159 = vadd.s32 %v145, 8
    %v160 = vadd.s32 %v145, 16
    %v161 = vadd.s32 %v145, 24
    %v162 = vadd.s32 %v145, 32
    %v163 = vadd.s32 %v145, 40
    %v164 = vadd.s32 %v145, 48
    %v165 = vadd.s32 %v145, 56
    %v166 = vadd.s32 %v145, 64
    %v167 = vadd.s32 %v145, 72
    %v168 = vadd.s32 %v145, 80
    %v169 = vadd.s32 %v145, 88
    %vm170 = vcmp.lt.s32.totalorder %v145, 0
    %v171 = vsub.s32 0, %v145
    %v172 = vsel %vm170, %v171, %v145
    %v173 = vshrl.u32 %v172, 5
    %v174 = vand.u32 %v172, 31
    %v175 = vsub.s32 0, %v174
    %v176 = vsel %vm170, %v175, %v174
    %vm177 = vcmp.lt.s32.totalorder %v159, 0
    %v178 = vsub.s32 0, %v159
    %v179 = vsel %vm177, %v178, %v159
    %v180 = vshrl.u32 %v179, 5
    %v181 = vand.u32 %v179, 31
    %v182 = vsub.s32 0, %v181
    %v183 = vsel %vm177, %v182, %v181
    %vm184 = vcmp.lt.s32.totalorder %v160, 0
    %v185 = vsub.s32 0, %v160
    %v186 = vsel %vm184, %v185, %v160
    %v187 = vshrl.u32 %v186, 5
    %v188 = vand.u32 %v186, 31
    %v189 = vsub.s32 0, %v188
    %v190 = vsel %vm184, %v189, %v188
    %vm191 = vcmp.lt.s32.totalorder %v161, 0
    %v192 = vsub.s32 0, %v161
    %v193 = vsel %vm191, %v192, %v161
    %v194 = vshrl.u32 %v193, 5
    %v195 = vand.u32 %v193, 31
    %v196 = vsub.s32 0, %v195
    %v197 = vsel %vm191, %v196, %v195
    %vm198 = vcmp.lt.s32.totalorder %v162, 0
    %v199 = vsub.s32 0, %v162
    %v200 = vsel %vm198, %v199, %v162
    %v201 = vshrl.u32 %v200, 5
    %v202 = vand.u32 %v200, 31
    %v203 = vsub.s32 0, %v202
    %v204 = vsel %vm198, %v203, %v202
    %vm205 = vcmp.lt.s32.totalorder %v163, 0
    %v206 = vsub.s32 0, %v163
    %v207 = vsel %vm205, %v206, %v163
    %v208 = vshrl.u32 %v207, 5
    %v209 = vand.u32 %v207, 31
    %v210 = vsub.s32 0, %v209
    %v211 = vsel %vm205, %v210, %v209
    %vm212 = vcmp.lt.s32.totalorder %v164, 0
    %v213 = vsub.s32 0, %v164
    %v214 = vsel %vm212, %v213, %v164
    %v215 = vshrl.u32 %v214, 5
    %v216 = vand.u32 %v214, 31
    %v217 = vsub.s32 0, %v216
    %v218 = vsel %vm212, %v217, %v216
    %vm219 = vcmp.lt.s32.totalorder %v165, 0
    %v220 = vsub.s32 0, %v165
    %v221 = vsel %vm219, %v220, %v165
    %v222 = vshrl.u32 %v221, 5
    %v223 = vand.u32 %v221, 31
    %v224 = vsub.s32 0, %v223
    %v225 = vsel %vm219, %v224, %v223
    %vm226 = vcmp.lt.s32.totalorder %v166, 0
    %v227 = vsub.s32 0, %v166
    %v228 = vsel %vm226, %v227, %v166
    %v229 = vshrl.u32 %v228, 5
    %v230 = vand.u32 %v228, 31
    %v231 = vsub.s32 0, %v230
    %v232 = vsel %vm226, %v231, %v230
    %vm233 = vcmp.lt.s32.totalorder %v167, 0
    %v234 = vsub.s32 0, %v167
    %v235 = vsel %vm233, %v234, %v167
    %v236 = vshrl.u32 %v235, 5
    %v237 = vand.u32 %v235, 31
    %v238 = vsub.s32 0, %v237
    %v239 = vsel %vm233, %v238, %v237
    %vm240 = vcmp.lt.s32.totalorder %v168, 0
    %v241 = vsub.s32 0, %v168
    %v242 = vsel %vm240, %v241, %v168
    %v243 = vshrl.u32 %v242, 5
    %v244 = vand.u32 %v242, 31
    %v245 = vsub.s32 0, %v244
    %v246 = vsel %vm240, %v245, %v244
    %vm247 = vcmp.lt.s32.totalorder %v169, 0
    %v248 = vsub.s32 0, %v169
    %v249 = vsel %vm247, %v248, %v169
    %v250 = vshrl.u32 %v249, 5
    %v251 = vand.u32 %v249, 31
    %v252 = vsub.s32 0, %v251
    %v253 = vsel %vm247, %v252, %v251
    %vm254 = vcmp.ne.s32.totalorder %v176, 0
    %vm255 = vcmp.ne.s32.totalorder %v183, 0
    %vm256 = vcmp.ne.s32.totalorder %v190, 0
    %vm257 = vcmp.ne.s32.totalorder %v197, 0
    %vm258 = vcmp.ne.s32.totalorder %v204, 0
    %vm259 = vcmp.ne.s32.totalorder %v211, 0
    %vm260 = vcmp.ne.s32.totalorder %v218, 0
    %vm261 = vcmp.ne.s32.totalorder %v225, 0
    %vm262 = vcmp.ne.s32.totalorder %v232, 0
    %vm263 = vcmp.ne.s32.totalorder %v239, 0
    %vm264 = vcmp.ne.s32.totalorder %v246, 0
    %vm265 = vcmp.ne.s32.totalorder %v253, 0
    %vm266 = vcmp.lt.s32.totalorder %v176, 0
    %vm267 = vcmp.lt.s32.totalorder %v183, 0
    %vm268 = vcmp.lt.s32.totalorder %v190, 0
    %vm269 = vcmp.lt.s32.totalorder %v197, 0
    %vm270 = vcmp.lt.s32.totalorder %v204, 0
    %vm271 = vcmp.lt.s32.totalorder %v211, 0
    %vm272 = vcmp.lt.s32.totalorder %v218, 0
    %vm273 = vcmp.lt.s32.totalorder %v225, 0
    %vm274 = vcmp.lt.s32.totalorder %v232, 0
    %vm275 = vcmp.lt.s32.totalorder %v239, 0
    %vm276 = vcmp.lt.s32.totalorder %v246, 0
    %vm277 = vcmp.lt.s32.totalorder %v253, 0
    %vm278 = vmand %vm266, %vm254
    %vm279 = vmand %vm267, %vm255
    %vm280 = vmand %vm268, %vm256
    %vm281 = vmand %vm269, %vm257
    %vm282 = vmand %vm270, %vm258
    %vm283 = vmand %vm271, %vm259
    %vm284 = vmand %vm272, %vm260
    %vm285 = vmand %vm273, %vm261
    %vm286 = vmand %vm274, %vm262
    %vm287 = vmand %vm275, %vm263
    %vm288 = vmand %vm276, %vm264
    %vm289 = vmand %vm277, %vm265
    %v290 = vadd.s32 %v176, 32
    %v291 = vadd.s32 %v183, 32
    %v292 = vadd.s32 %v190, 32
    %v293 = vadd.s32 %v197, 32
    %v294 = vadd.s32 %v204, 32
    %v295 = vadd.s32 %v211, 32
    %v296 = vadd.s32 %v218, 32
    %v297 = vadd.s32 %v225, 32
    %v298 = vadd.s32 %v232, 32
    %v299 = vadd.s32 %v239, 32
    %v300 = vadd.s32 %v246, 32
    %v301 = vadd.s32 %v253, 32
    %v302 = vsel %vm278, %v290, %v176
    %v303 = vsel %vm279, %v291, %v183
    %v304 = vsel %vm280, %v292, %v190
    %v305 = vsel %vm281, %v293, %v197
    %v306 = vsel %vm282, %v294, %v204
    %v307 = vsel %vm283, %v295, %v211
    %v308 = vsel %vm284, %v296, %v218
    %v309 = vsel %vm285, %v297, %v225
    %v310 = vsel %vm286, %v298, %v232
    %v311 = vsel %vm287, %v299, %v239
    %v312 = vsel %vm288, %v300, %v246
    %v313 = vsel %vm289, %v301, %v253
    %vm314 = vcmp.eq.s32.totalorder %v302, 0
    %vm315 = vcmp.eq.s32.totalorder %v303, 0
    %vm316 = vcmp.eq.s32.totalorder %v304, 0
    %vm317 = vcmp.eq.s32.totalorder %v305, 0
    %vm318 = vcmp.eq.s32.totalorder %v306, 0
    %vm319 = vcmp.eq.s32.totalorder %v307, 0
    %vm320 = vcmp.eq.s32.totalorder %v308, 0
    %vm321 = vcmp.eq.s32.totalorder %v309, 0
    %vm322 = vcmp.eq.s32.totalorder %v310, 0
    %vm323 = vcmp.eq.s32.totalorder %v311, 0
    %vm324 = vcmp.eq.s32.totalorder %v312, 0
    %vm325 = vcmp.eq.s32.totalorder %v313, 0
    %v326 = vsel %vm314, 1, 0
    %v327 = vsel %vm315, 1, 0
    %v328 = vsel %vm316, 1, 0
    %v329 = vsel %vm317, 1, 0
    %v330 = vsel %vm318, 1, 0
    %v331 = vsel %vm319, 1, 0
    %v332 = vsel %vm320, 1, 0
    %v333 = vsel %vm321, 1, 0
    %v334 = vsel %vm322, 1, 0
    %v335 = vsel %vm323, 1, 0
    %v336 = vsel %vm324, 1, 0
    %v337 = vsel %vm325, 1, 0
    %vm338 = vcmp.eq.s32.totalorder %v326, 1
    %vm339 = vcmp.eq.s32.totalorder %v327, 1
    %vm340 = vcmp.eq.s32.totalorder %v328, 1
    %vm341 = vcmp.eq.s32.totalorder %v329, 1
    %vm342 = vcmp.eq.s32.totalorder %v330, 1
    %vm343 = vcmp.eq.s32.totalorder %v331, 1
    %vm344 = vcmp.eq.s32.totalorder %v332, 1
    %vm345 = vcmp.eq.s32.totalorder %v333, 1
    %vm346 = vcmp.eq.s32.totalorder %v334, 1
    %vm347 = vcmp.eq.s32.totalorder %v335, 1
    %vm348 = vcmp.eq.s32.totalorder %v336, 1
    %vm349 = vcmp.eq.s32.totalorder %v337, 1
    %v350 = vsel %vm338, -1e+30, %v158
    %v351 = vsel %vm339, -1e+30, %v157
    %v352 = vsel %vm340, -1e+30, %v156
    %v353 = vsel %vm341, -1e+30, %v155
    %v354 = vsel %vm342, -1e+30, %v154
    %v355 = vsel %vm343, -1e+30, %v153
    %v356 = vsel %vm344, -1e+30, %v152
    %v357 = vsel %vm345, -1e+30, %v151
    %v358 = vsel %vm346, -1e+30, %v150
    %v359 = vsel %vm347, -1e+30, %v149
    %v360 = vsel %vm348, -1e+30, %v148
    %v361 = vsel %vm349, -1e+30, %v147
    %374 = vrot.lane.b32.xlu0 %v120, 64
    %v375 = vpop.permute.xlu0 %374
    %376 = vrot.lane.b32.xlu0 %v121, 64
    %v377 = vpop.permute.xlu0 %376
    %378 = vrot.lane.b32.xlu0 %v122, 64
    %v379 = vpop.permute.xlu0 %378
    %380 = vrot.lane.b32.xlu0 %v123, 64
    %v381 = vpop.permute.xlu0 %380
    %382 = vrot.lane.b32.xlu0 %v124, 64
    %v383 = vpop.permute.xlu0 %382
    %384 = vrot.lane.b32.xlu0 %v125, 64
    %v385 = vpop.permute.xlu0 %384
    %386 = vrot.lane.b32.xlu0 %v126, 64
    %v387 = vpop.permute.xlu0 %386
    %388 = vrot.lane.b32.xlu0 %v127, 64
    %v389 = vpop.permute.xlu0 %388
    %390 = vrot.lane.b32.xlu0 %v128, 64
    %v391 = vpop.permute.xlu0 %390
    %392 = vrot.lane.b32.xlu0 %v129, 64
    %v393 = vpop.permute.xlu0 %392
    %394 = vrot.lane.b32.xlu0 %v130, 64
    %v395 = vpop.permute.xlu0 %394
    %396 = vrot.lane.b32.xlu0 %v131, 64
    %v397 = vpop.permute.xlu0 %396
    %v410 = vmax.f32 %v120, %v375
    %v411 = vmax.f32 %v121, %v377
    %v412 = vmax.f32 %v122, %v379
    %v413 = vmax.f32 %v123, %v381
    %v414 = vmax.f32 %v124, %v383
    %v415 = vmax.f32 %v125, %v385
    %v416 = vmax.f32 %v126, %v387
    %v417 = vmax.f32 %v127, %v389
    %v418 = vmax.f32 %v128, %v391
    %v419 = vmax.f32 %v129, %v393
    %v420 = vmax.f32 %v130, %v395
    %v421 = vmax.f32 %v131, %v397
    %434 = vrot.lane.b32.xlu0 %v350, 64
    %v435 = vpop.permute.xlu0 %434
    %436 = vrot.lane.b32.xlu0 %v351, 64
    %v437 = vpop.permute.xlu0 %436
    %438 = vrot.lane.b32.xlu0 %v352, 64
    %v439 = vpop.permute.xlu0 %438
    %440 = vrot.lane.b32.xlu0 %v353, 64
    %v441 = vpop.permute.xlu0 %440
    %442 = vrot.lane.b32.xlu0 %v354, 64
    %v443 = vpop.permute.xlu0 %442
    %444 = vrot.lane.b32.xlu0 %v355, 64
    %v445 = vpop.permute.xlu0 %444
    %446 = vrot.lane.b32.xlu0 %v356, 64
    %v447 = vpop.permute.xlu0 %446
    %448 = vrot.lane.b32.xlu0 %v357, 64
    %v449 = vpop.permute.xlu0 %448
    %450 = vrot.lane.b32.xlu0 %v358, 64
    %v451 = vpop.permute.xlu0 %450
    %452 = vrot.lane.b32.xlu0 %v359, 64
    %v453 = vpop.permute.xlu0 %452
    %454 = vrot.lane.b32.xlu0 %v360, 64
    %v455 = vpop.permute.xlu0 %454
    %456 = vrot.lane.b32.xlu0 %v361, 64
    %v457 = vpop.permute.xlu0 %456
    %v470 = vmax.f32 %v410, %v435
    %v471 = vmax.f32 %v411, %v437
    %v472 = vmax.f32 %v412, %v439
    %v473 = vmax.f32 %v413, %v441
    %v474 = vmax.f32 %v414, %v443
    %v475 = vmax.f32 %v415, %v445
    %v476 = vmax.f32 %v416, %v447
    %v477 = vmax.f32 %v417, %v449
    %v478 = vmax.f32 %v418, %v451
    %v479 = vmax.f32 %v419, %v453
    %v480 = vmax.f32 %v420, %v455
    %v481 = vmax.f32 %v421, %v457
    %v482 = vld [vmem:[%s1] sm:$0xff]
    %v483 = vld [vmem:[%s1 + $0x8] sm:$0xff]
    %v484 = vld [vmem:[%s1 + $0x10] sm:$0xff]
    %v485 = vld [vmem:[%s1 + $0x18] sm:$0xff]
    %v486 = vld [vmem:[%s1 + $0x20] sm:$0xff]
    %v487 = vld [vmem:[%s1 + $0x28] sm:$0xff]
    %v488 = vld [vmem:[%s1 + $0x30] sm:$0xff]
    %v489 = vld [vmem:[%s1 + $0x38] sm:$0xff]
    %vm490 = vcmask 523264
    %v492 = vsel %vm490, %v470, 0
    %v495 = vsel %vm490, %v471, 0
    %v498 = vsel %vm490, %v472, 0
    %v501 = vsel %vm490, %v473, 0
    %v504 = vsel %vm490, %v474, 0
    %v507 = vsel %vm490, %v475, 0
    %v510 = vsel %vm490, %v476, 0
    %v513 = vsel %vm490, %v477, 0
    %v516 = vsel %vm490, %v478, 0
    %v519 = vsel %vm490, %v479, 0
    %v522 = vsel %vm490, %v480, 0
    %v525 = vsel %vm490, %v481, 0
    %527 = vmatpush.msra.mxu0 0.0
    %528 = vmatpush.msra.mxu0 0.0
    %529 = vmatpush.msra.mxu0 0.0
    %530 = vmatpush.msra.mxu0 0.0
    %531 = vmatpush.msra.mxu0 0.0
    %532 = vmatpush.msra.mxu0 0.0
    %533 = vmatpush.msra.mxu0 0.0
    %534 = vmatpush.msra.mxu0 0.0
    %v535 = vand.u32 %v489, 4294901760
    %536 = vmatpush.msra.mxu0 %v535
    %v537 = vand.u32 %v488, 4294901760
    %538 = vmatpush.msra.mxu0 %v537
    %v539 = vand.u32 %v487, 4294901760
    %540 = vmatpush.msra.mxu0 %v539
    %v541 = vand.u32 %v486, 4294901760
    %542 = vmatpush.msra.mxu0 %v541
    %v543 = vand.u32 %v485, 4294901760
    %544 = vmatpush.msra.mxu0 %v543
    %v545 = vand.u32 %v484, 4294901760
    %546 = vmatpush.msra.mxu0 %v545
    %v547 = vand.u32 %v483, 4294901760
    %548 = vmatpush.msra.mxu0 %v547
    %v549 = vand.u32 %v482, 4294901760
    %550 = vmatpush.msra.mxu0 %v549
    %v551 = vand.u32 %v492, 4294901760
    %v552 = vsub.f32 %v492, %v551
    %v553 = vand.u32 %v552, 4294901760
    %v554 = vsub.f32 %v552, %v553
    %v555 = vand.u32 %v554, 4294901760
    %556 = vmatmul.f32.gmra.mxu0 %v555
    %v557 = vpop.f32.mrf.mxu0
    %v558 = vadd.f32 0.0, %v557
    %v559 = vand.u32 %v495, 4294901760
    %v560 = vsub.f32 %v495, %v559
    %v561 = vand.u32 %v560, 4294901760
    %v562 = vsub.f32 %v560, %v561
    %v563 = vand.u32 %v562, 4294901760
    %564 = vmatmul.f32.gmra.mxu0 %v563
    %v565 = vpop.f32.mrf.mxu0
    %v566 = vadd.f32 0.0, %v565
    %v567 = vand.u32 %v498, 4294901760
    %v568 = vsub.f32 %v498, %v567
    %v569 = vand.u32 %v568, 4294901760
    %v570 = vsub.f32 %v568, %v569
    %v571 = vand.u32 %v570, 4294901760
    %572 = vmatmul.f32.gmra.mxu0 %v571
    %v573 = vpop.f32.mrf.mxu0
    %v574 = vadd.f32 0.0, %v573
    %v575 = vand.u32 %v501, 4294901760
    %v576 = vsub.f32 %v501, %v575
    %v577 = vand.u32 %v576, 4294901760
    %v578 = vsub.f32 %v576, %v577
    %v579 = vand.u32 %v578, 4294901760
    %580 = vmatmul.f32.gmra.mxu0 %v579
    %v581 = vpop.f32.mrf.mxu0
    %v582 = vadd.f32 0.0, %v581
    %v583 = vand.u32 %v504, 4294901760
    %v584 = vsub.f32 %v504, %v583
    %v585 = vand.u32 %v584, 4294901760
    %v586 = vsub.f32 %v584, %v585
    %v587 = vand.u32 %v586, 4294901760
    %588 = vmatmul.f32.gmra.mxu0 %v587
    %v589 = vpop.f32.mrf.mxu0
    %v590 = vadd.f32 0.0, %v589
    %v591 = vand.u32 %v507, 4294901760
    %v592 = vsub.f32 %v507, %v591
    %v593 = vand.u32 %v592, 4294901760
    %v594 = vsub.f32 %v592, %v593
    %v595 = vand.u32 %v594, 4294901760
    %596 = vmatmul.f32.gmra.mxu0 %v595
    %v597 = vpop.f32.mrf.mxu0
    %v598 = vadd.f32 0.0, %v597
    %v599 = vand.u32 %v510, 4294901760
    %v600 = vsub.f32 %v510, %v599
    %v601 = vand.u32 %v600, 4294901760
    %v602 = vsub.f32 %v600, %v601
    %v603 = vand.u32 %v602, 4294901760
    %604 = vmatmul.f32.gmra.mxu0 %v603
    %v605 = vpop.f32.mrf.mxu0
    %v606 = vadd.f32 0.0, %v605
    %v607 = vand.u32 %v513, 4294901760
    %v608 = vsub.f32 %v513, %v607
    %v609 = vand.u32 %v608, 4294901760
    %v610 = vsub.f32 %v608, %v609
    %v611 = vand.u32 %v610, 4294901760
    %612 = vmatmul.f32.gmra.mxu0 %v611
    %v613 = vpop.f32.mrf.mxu0
    %v614 = vadd.f32 0.0, %v613
    %v615 = vand.u32 %v516, 4294901760
    %v616 = vsub.f32 %v516, %v615
    %v617 = vand.u32 %v616, 4294901760
    %v618 = vsub.f32 %v616, %v617
    %v619 = vand.u32 %v618, 4294901760
    %620 = vmatmul.f32.gmra.mxu0 %v619
    %v621 = vpop.f32.mrf.mxu0
    %v622 = vadd.f32 0.0, %v621
    %v623 = vand.u32 %v519, 4294901760
    %v624 = vsub.f32 %v519, %v623
    %v625 = vand.u32 %v624, 4294901760
    %v626 = vsub.f32 %v624, %v625
    %v627 = vand.u32 %v626, 4294901760
    %628 = vmatmul.f32.gmra.mxu0 %v627
    %v629 = vpop.f32.mrf.mxu0
    %v630 = vadd.f32 0.0, %v629
    %v631 = vand.u32 %v522, 4294901760
    %v632 = vsub.f32 %v522, %v631
    %v633 = vand.u32 %v632, 4294901760
    %v634 = vsub.f32 %v632, %v633
    %v635 = vand.u32 %v634, 4294901760
    %636 = vmatmul.f32.gmra.mxu0 %v635
    %v637 = vpop.f32.mrf.mxu0
    %v638 = vadd.f32 0.0, %v637
    %v639 = vand.u32 %v525, 4294901760
    %v640 = vsub.f32 %v525, %v639
    %v641 = vand.u32 %v640, 4294901760
    %v642 = vsub.f32 %v640, %v641
    %v643 = vand.u32 %v642, 4294901760
    %644 = vmatmul.f32.gmra.mxu0 %v643
    %v645 = vpop.f32.mrf.mxu0
    %v646 = vadd.f32 0.0, %v645
    %647 = vdwg.mxu0
    %648 = vmatpush.msra.mxu0 0.0
    %649 = vmatpush.msra.mxu0 0.0
    %650 = vmatpush.msra.mxu0 0.0
    %651 = vmatpush.msra.mxu0 0.0
    %652 = vmatpush.msra.mxu0 0.0
    %653 = vmatpush.msra.mxu0 0.0
    %654 = vmatpush.msra.mxu0 0.0
    %655 = vmatpush.msra.mxu0 0.0
    %v656 = vand.u32 %v489, 4294901760
    %v657 = vsub.f32 %v489, %v656
    %v658 = vand.u32 %v657, 4294901760
    %v659 = vsub.f32 %v657, %v658
    %v660 = vand.u32 %v659, 4294901760
    %661 = vmatpush.msra.mxu0 %v660
    %v662 = vand.u32 %v488, 4294901760
    %v663 = vsub.f32 %v488, %v662
    %v664 = vand.u32 %v663, 4294901760
    %v665 = vsub.f32 %v663, %v664
    %v666 = vand.u32 %v665, 4294901760
    %667 = vmatpush.msra.mxu0 %v666
    %v668 = vand.u32 %v487, 4294901760
    %v669 = vsub.f32 %v487, %v668
    %v670 = vand.u32 %v669, 4294901760
    %v671 = vsub.f32 %v669, %v670
    %v672 = vand.u32 %v671, 4294901760
    %673 = vmatpush.msra.mxu0 %v672
    %v674 = vand.u32 %v486, 4294901760
    %v675 = vsub.f32 %v486, %v674
    %v676 = vand.u32 %v675, 4294901760
    %v677 = vsub.f32 %v675, %v676
    %v678 = vand.u32 %v677, 4294901760
    %679 = vmatpush.msra.mxu0 %v678
    %v680 = vand.u32 %v485, 4294901760
    %v681 = vsub.f32 %v485, %v680
    %v682 = vand.u32 %v681, 4294901760
    %v683 = vsub.f32 %v681, %v682
    %v684 = vand.u32 %v683, 4294901760
    %685 = vmatpush.msra.mxu0 %v684
    %v686 = vand.u32 %v484, 4294901760
    %v687 = vsub.f32 %v484, %v686
    %v688 = vand.u32 %v687, 4294901760
    %v689 = vsub.f32 %v687, %v688
    %v690 = vand.u32 %v689, 4294901760
    %691 = vmatpush.msra.mxu0 %v690
    %v692 = vand.u32 %v483, 4294901760
    %v693 = vsub.f32 %v483, %v692
    %v694 = vand.u32 %v693, 4294901760
    %v695 = vsub.f32 %v693, %v694
    %v696 = vand.u32 %v695, 4294901760
    %697 = vmatpush.msra.mxu0 %v696
    %v698 = vand.u32 %v482, 4294901760
    %v699 = vsub.f32 %v482, %v698
    %v700 = vand.u32 %v699, 4294901760
    %v701 = vsub.f32 %v699, %v700
    %v702 = vand.u32 %v701, 4294901760
    %703 = vmatpush.msra.mxu0 %v702
    %v704 = vand.u32 %v492, 4294901760
    %705 = vmatmul.f32.gmra.mxu0 %v704
    %v706 = vpop.f32.mrf.mxu0
    %v707 = vadd.f32 %v558, %v706
    %v708 = vand.u32 %v495, 4294901760
    %709 = vmatmul.f32.gmra.mxu0 %v708
    %v710 = vpop.f32.mrf.mxu0
    %v711 = vadd.f32 %v566, %v710
    %v712 = vand.u32 %v498, 4294901760
    %713 = vmatmul.f32.gmra.mxu0 %v712
    %v714 = vpop.f32.mrf.mxu0
    %v715 = vadd.f32 %v574, %v714
    %v716 = vand.u32 %v501, 4294901760
    %717 = vmatmul.f32.gmra.mxu0 %v716
    %v718 = vpop.f32.mrf.mxu0
    %v719 = vadd.f32 %v582, %v718
    %v720 = vand.u32 %v504, 4294901760
    %721 = vmatmul.f32.gmra.mxu0 %v720
    %v722 = vpop.f32.mrf.mxu0
    %v723 = vadd.f32 %v590, %v722
    %v724 = vand.u32 %v507, 4294901760
    %725 = vmatmul.f32.gmra.mxu0 %v724
    %v726 = vpop.f32.mrf.mxu0
    %v727 = vadd.f32 %v598, %v726
    %v728 = vand.u32 %v510, 4294901760
    %729 = vmatmul.f32.gmra.mxu0 %v728
    %v730 = vpop.f32.mrf.mxu0
    %v731 = vadd.f32 %v606, %v730
    %v732 = vand.u32 %v513, 4294901760
    %733 = vmatmul.f32.gmra.mxu0 %v732
    %v734 = vpop.f32.mrf.mxu0
    %v735 = vadd.f32 %v614, %v734
    %v736 = vand.u32 %v516, 4294901760
    %737 = vmatmul.f32.gmra.mxu0 %v736
    %v738 = vpop.f32.mrf.mxu0
    %v739 = vadd.f32 %v622, %v738
    %v740 = vand.u32 %v519, 4294901760
    %741 = vmatmul.f32.gmra.mxu0 %v740
    %v742 = vpop.f32.mrf.mxu0
    %v743 = vadd.f32 %v630, %v742
    %v744 = vand.u32 %v522, 4294901760
    %745 = vmatmul.f32.gmra.mxu0 %v744
    %v746 = vpop.f32.mrf.mxu0
    %v747 = vadd.f32 %v638, %v746
    %v748 = vand.u32 %v525, 4294901760
    %749 = vmatmul.f32.gmra.mxu0 %v748
    %v750 = vpop.f32.mrf.mxu0
    %v751 = vadd.f32 %v646, %v750
    %752 = vdwg.mxu0
    %753 = vmatpush.msra.mxu0 0.0
    %754 = vmatpush.msra.mxu0 0.0
    %755 = vmatpush.msra.mxu0 0.0
    %756 = vmatpush.msra.mxu0 0.0
    %757 = vmatpush.msra.mxu0 0.0
    %758 = vmatpush.msra.mxu0 0.0
    %759 = vmatpush.msra.mxu0 0.0
    %760 = vmatpush.msra.mxu0 0.0
    %v761 = vand.u32 %v489, 4294901760
    %v762 = vsub.f32 %v489, %v761
    %763 = vmatpush.msra.mxu0 %v762
    %v764 = vand.u32 %v488, 4294901760
    %v765 = vsub.f32 %v488, %v764
    %766 = vmatpush.msra.mxu0 %v765
    %v767 = vand.u32 %v487, 4294901760
    %v768 = vsub.f32 %v487, %v767
    %769 = vmatpush.msra.mxu0 %v768
    %v770 = vand.u32 %v486, 4294901760
    %v771 = vsub.f32 %v486, %v770
    %772 = vmatpush.msra.mxu0 %v771
    %v773 = vand.u32 %v485, 4294901760
    %v774 = vsub.f32 %v485, %v773
    %775 = vmatpush.msra.mxu0 %v774
    %v776 = vand.u32 %v484, 4294901760
    %v777 = vsub.f32 %v484, %v776
    %778 = vmatpush.msra.mxu0 %v777
    %v779 = vand.u32 %v483, 4294901760
    %v780 = vsub.f32 %v483, %v779
    %781 = vmatpush.msra.mxu0 %v780
    %v782 = vand.u32 %v482, 4294901760
    %v783 = vsub.f32 %v482, %v782
    %784 = vmatpush.msra.mxu0 %v783
    %v785 = vand.u32 %v492, 4294901760
    %v786 = vsub.f32 %v492, %v785
    %787 = vmatmul.f32.gmra.mxu0 %v786
    %v788 = vpop.f32.mrf.mxu0
    %v789 = vadd.f32 %v707, %v788
    %v790 = vand.u32 %v495, 4294901760
    %v791 = vsub.f32 %v495, %v790
    %792 = vmatmul.f32.gmra.mxu0 %v791
    %v793 = vpop.f32.mrf.mxu0
    %v794 = vadd.f32 %v711, %v793
    %v795 = vand.u32 %v498, 4294901760
    %v796 = vsub.f32 %v498, %v795
    %797 = vmatmul.f32.gmra.mxu0 %v796
    %v798 = vpop.f32.mrf.mxu0
    %v799 = vadd.f32 %v715, %v798
    %v800 = vand.u32 %v501, 4294901760
    %v801 = vsub.f32 %v501, %v800
    %802 = vmatmul.f32.gmra.mxu0 %v801
    %v803 = vpop.f32.mrf.mxu0
    %v804 = vadd.f32 %v719, %v803
    %v805 = vand.u32 %v504, 4294901760
    %v806 = vsub.f32 %v504, %v805
    %807 = vmatmul.f32.gmra.mxu0 %v806
    %v808 = vpop.f32.mrf.mxu0
    %v809 = vadd.f32 %v723, %v808
    %v810 = vand.u32 %v507, 4294901760
    %v811 = vsub.f32 %v507, %v810
    %812 = vmatmul.f32.gmra.mxu0 %v811
    %v813 = vpop.f32.mrf.mxu0
    %v814 = vadd.f32 %v727, %v813
    %v815 = vand.u32 %v510, 4294901760
    %v816 = vsub.f32 %v510, %v815
    %817 = vmatmul.f32.gmra.mxu0 %v816
    %v818 = vpop.f32.mrf.mxu0
    %v819 = vadd.f32 %v731, %v818
    %v820 = vand.u32 %v513, 4294901760
    %v821 = vsub.f32 %v513, %v820
    %822 = vmatmul.f32.gmra.mxu0 %v821
    %v823 = vpop.f32.mrf.mxu0
    %v824 = vadd.f32 %v735, %v823
    %v825 = vand.u32 %v516, 4294901760
    %v826 = vsub.f32 %v516, %v825
    %827 = vmatmul.f32.gmra.mxu0 %v826
    %v828 = vpop.f32.mrf.mxu0
    %v829 = vadd.f32 %v739, %v828
    %v830 = vand.u32 %v519, 4294901760
    %v831 = vsub.f32 %v519, %v830
    %832 = vmatmul.f32.gmra.mxu0 %v831
    %v833 = vpop.f32.mrf.mxu0
    %v834 = vadd.f32 %v743, %v833
    %v835 = vand.u32 %v522, 4294901760
    %v836 = vsub.f32 %v522, %v835
    %837 = vmatmul.f32.gmra.mxu0 %v836
    %v838 = vpop.f32.mrf.mxu0
    %v839 = vadd.f32 %v747, %v838
    %v840 = vand.u32 %v525, 4294901760
    %v841 = vsub.f32 %v525, %v840
    %842 = vmatmul.f32.gmra.mxu0 %v841
    %v843 = vpop.f32.mrf.mxu0
    %v844 = vadd.f32 %v751, %v843
    %845 = vdwg.mxu0
    %846 = vmatpush.msra.mxu0 0.0
    %847 = vmatpush.msra.mxu0 0.0
    %848 = vmatpush.msra.mxu0 0.0
    %849 = vmatpush.msra.mxu0 0.0
    %850 = vmatpush.msra.mxu0 0.0
    %851 = vmatpush.msra.mxu0 0.0
    %852 = vmatpush.msra.mxu0 0.0
    %853 = vmatpush.msra.mxu0 0.0
    %v854 = vand.u32 %v489, 4294901760
    %855 = vmatpush.msra.mxu0 %v854
    %v856 = vand.u32 %v488, 4294901760
    %857 = vmatpush.msra.mxu0 %v856
    %v858 = vand.u32 %v487, 4294901760
    %859 = vmatpush.msra.mxu0 %v858
    %v860 = vand.u32 %v486, 4294901760
    %861 = vmatpush.msra.mxu0 %v860
    %v862 = vand.u32 %v485, 4294901760
    %863 = vmatpush.msra.mxu0 %v862
    %v864 = vand.u32 %v484, 4294901760
    %865 = vmatpush.msra.mxu0 %v864
    %v866 = vand.u32 %v483, 4294901760
    %867 = vmatpush.msra.mxu0 %v866
    %v868 = vand.u32 %v482, 4294901760
    %869 = vmatpush.msra.mxu0 %v868
    %v870 = vand.u32 %v492, 4294901760
    %v871 = vsub.f32 %v492, %v870
    %v872 = vand.u32 %v871, 4294901760
    %873 = vmatmul.f32.gmra.mxu0 %v872
    %v874 = vpop.f32.mrf.mxu0
    %v875 = vadd.f32 %v789, %v874
    %v876 = vand.u32 %v495, 4294901760
    %v877 = vsub.f32 %v495, %v876
    %v878 = vand.u32 %v877, 4294901760
    %879 = vmatmul.f32.gmra.mxu0 %v878
    %v880 = vpop.f32.mrf.mxu0
    %v881 = vadd.f32 %v794, %v880
    %v882 = vand.u32 %v498, 4294901760
    %v883 = vsub.f32 %v498, %v882
    %v884 = vand.u32 %v883, 4294901760
    %885 = vmatmul.f32.gmra.mxu0 %v884
    %v886 = vpop.f32.mrf.mxu0
    %v887 = vadd.f32 %v799, %v886
    %v888 = vand.u32 %v501, 4294901760
    %v889 = vsub.f32 %v501, %v888
    %v890 = vand.u32 %v889, 4294901760
    %891 = vmatmul.f32.gmra.mxu0 %v890
    %v892 = vpop.f32.mrf.mxu0
    %v893 = vadd.f32 %v804, %v892
    %v894 = vand.u32 %v504, 4294901760
    %v895 = vsub.f32 %v504, %v894
    %v896 = vand.u32 %v895, 4294901760
    %897 = vmatmul.f32.gmra.mxu0 %v896
    %v898 = vpop.f32.mrf.mxu0
    %v899 = vadd.f32 %v809, %v898
    %v900 = vand.u32 %v507, 4294901760
    %v901 = vsub.f32 %v507, %v900
    %v902 = vand.u32 %v901, 4294901760
    %903 = vmatmul.f32.gmra.mxu0 %v902
    %v904 = vpop.f32.mrf.mxu0
    %v905 = vadd.f32 %v814, %v904
    %v906 = vand.u32 %v510, 4294901760
    %v907 = vsub.f32 %v510, %v906
    %v908 = vand.u32 %v907, 4294901760
    %909 = vmatmul.f32.gmra.mxu0 %v908
    %v910 = vpop.f32.mrf.mxu0
    %v911 = vadd.f32 %v819, %v910
    %v912 = vand.u32 %v513, 4294901760
    %v913 = vsub.f32 %v513, %v912
    %v914 = vand.u32 %v913, 4294901760
    %915 = vmatmul.f32.gmra.mxu0 %v914
    %v916 = vpop.f32.mrf.mxu0
    %v917 = vadd.f32 %v824, %v916
    %v918 = vand.u32 %v516, 4294901760
    %v919 = vsub.f32 %v516, %v918
    %v920 = vand.u32 %v919, 4294901760
    %921 = vmatmul.f32.gmra.mxu0 %v920
    %v922 = vpop.f32.mrf.mxu0
    %v923 = vadd.f32 %v829, %v922
    %v924 = vand.u32 %v519, 4294901760
    %v925 = vsub.f32 %v519, %v924
    %v926 = vand.u32 %v925, 4294901760
    %927 = vmatmul.f32.gmra.mxu0 %v926
    %v928 = vpop.f32.mrf.mxu0
    %v929 = vadd.f32 %v834, %v928
    %v930 = vand.u32 %v522, 4294901760
    %v931 = vsub.f32 %v522, %v930
    %v932 = vand.u32 %v931, 4294901760
    %933 = vmatmul.f32.gmra.mxu0 %v932
    %v934 = vpop.f32.mrf.mxu0
    %v935 = vadd.f32 %v839, %v934
    %v936 = vand.u32 %v525, 4294901760
    %v937 = vsub.f32 %v525, %v936
    %v938 = vand.u32 %v937, 4294901760
    %939 = vmatmul.f32.gmra.mxu0 %v938
    %v940 = vpop.f32.mrf.mxu0
    %v941 = vadd.f32 %v844, %v940
    %942 = vdwg.mxu0
    %943 = vmatpush.msra.mxu0 0.0
    %944 = vmatpush.msra.mxu0 0.0
    %945 = vmatpush.msra.mxu0 0.0
    %946 = vmatpush.msra.mxu0 0.0
    %947 = vmatpush.msra.mxu0 0.0
    %948 = vmatpush.msra.mxu0 0.0
    %949 = vmatpush.msra.mxu0 0.0
    %950 = vmatpush.msra.mxu0 0.0
    %v951 = vand.u32 %v489, 4294901760
    %v952 = vsub.f32 %v489, %v951
    %v953 = vand.u32 %v952, 4294901760
    %954 = vmatpush.msra.mxu0 %v953
    %v955 = vand.u32 %v488, 4294901760
    %v956 = vsub.f32 %v488, %v955
    %v957 = vand.u32 %v956, 4294901760
    %958 = vmatpush.msra.mxu0 %v957
    %v959 = vand.u32 %v487, 4294901760
    %v960 = vsub.f32 %v487, %v959
    %v961 = vand.u32 %v960, 4294901760
    %962 = vmatpush.msra.mxu0 %v961
    %v963 = vand.u32 %v486, 4294901760
    %v964 = vsub.f32 %v486, %v963
    %v965 = vand.u32 %v964, 4294901760
    %966 = vmatpush.msra.mxu0 %v965
    %v967 = vand.u32 %v485, 4294901760
    %v968 = vsub.f32 %v485, %v967
    %v969 = vand.u32 %v968, 4294901760
    %970 = vmatpush.msra.mxu0 %v969
    %v971 = vand.u32 %v484, 4294901760
    %v972 = vsub.f32 %v484, %v971
    %v973 = vand.u32 %v972, 4294901760
    %974 = vmatpush.msra.mxu0 %v973
    %v975 = vand.u32 %v483, 4294901760
    %v976 = vsub.f32 %v483, %v975
    %v977 = vand.u32 %v976, 4294901760
    %978 = vmatpush.msra.mxu0 %v977
    %v979 = vand.u32 %v482, 4294901760
    %v980 = vsub.f32 %v482, %v979
    %v981 = vand.u32 %v980, 4294901760
    %982 = vmatpush.msra.mxu0 %v981
    %v983 = vand.u32 %v492, 4294901760
    %984 = vmatmul.f32.gmra.mxu0 %v983
    %v985 = vpop.f32.mrf.mxu0
    %v986 = vadd.f32 %v875, %v985
    %v987 = vand.u32 %v495, 4294901760
    %988 = vmatmul.f32.gmra.mxu0 %v987
    %v989 = vpop.f32.mrf.mxu0
    %v990 = vadd.f32 %v881, %v989
    %v991 = vand.u32 %v498, 4294901760
    %992 = vmatmul.f32.gmra.mxu0 %v991
    %v993 = vpop.f32.mrf.mxu0
    %v994 = vadd.f32 %v887, %v993
    %v995 = vand.u32 %v501, 4294901760
    %996 = vmatmul.f32.gmra.mxu0 %v995
    %v997 = vpop.f32.mrf.mxu0
    %v998 = vadd.f32 %v893, %v997
    %v999 = vand.u32 %v504, 4294901760
    %1000 = vmatmul.f32.gmra.mxu0 %v999
    %v1001 = vpop.f32.mrf.mxu0
    %v1002 = vadd.f32 %v899, %v1001
    %v1003 = vand.u32 %v507, 4294901760
    %1004 = vmatmul.f32.gmra.mxu0 %v1003
    %v1005 = vpop.f32.mrf.mxu0
    %v1006 = vadd.f32 %v905, %v1005
    %v1007 = vand.u32 %v510, 4294901760
    %1008 = vmatmul.f32.gmra.mxu0 %v1007
    %v1009 = vpop.f32.mrf.mxu0
    %v1010 = vadd.f32 %v911, %v1009
    %v1011 = vand.u32 %v513, 4294901760
    %1012 = vmatmul.f32.gmra.mxu0 %v1011
    %v1013 = vpop.f32.mrf.mxu0
    %v1014 = vadd.f32 %v917, %v1013
    %v1015 = vand.u32 %v516, 4294901760
    %1016 = vmatmul.f32.gmra.mxu0 %v1015
    %v1017 = vpop.f32.mrf.mxu0
    %v1018 = vadd.f32 %v923, %v1017
    %v1019 = vand.u32 %v519, 4294901760
    %1020 = vmatmul.f32.gmra.mxu0 %v1019
    %v1021 = vpop.f32.mrf.mxu0
    %v1022 = vadd.f32 %v929, %v1021
    %v1023 = vand.u32 %v522, 4294901760
    %1024 = vmatmul.f32.gmra.mxu0 %v1023
    %v1025 = vpop.f32.mrf.mxu0
    %v1026 = vadd.f32 %v935, %v1025
    %v1027 = vand.u32 %v525, 4294901760
    %1028 = vmatmul.f32.gmra.mxu0 %v1027
    %v1029 = vpop.f32.mrf.mxu0
    %v1030 = vadd.f32 %v941, %v1029
    %1031 = vdwg.mxu0
    %1032 = vmatpush.msra.mxu0 0.0
    %1033 = vmatpush.msra.mxu0 0.0
    %1034 = vmatpush.msra.mxu0 0.0
    %1035 = vmatpush.msra.mxu0 0.0
    %1036 = vmatpush.msra.mxu0 0.0
    %1037 = vmatpush.msra.mxu0 0.0
    %1038 = vmatpush.msra.mxu0 0.0
    %1039 = vmatpush.msra.mxu0 0.0
    %v1040 = vand.u32 %v489, 4294901760
    %1041 = vmatpush.msra.mxu0 %v1040
    %v1042 = vand.u32 %v488, 4294901760
    %1043 = vmatpush.msra.mxu0 %v1042
    %v1044 = vand.u32 %v487, 4294901760
    %1045 = vmatpush.msra.mxu0 %v1044
    %v1046 = vand.u32 %v486, 4294901760
    %1047 = vmatpush.msra.mxu0 %v1046
    %v1048 = vand.u32 %v485, 4294901760
    %1049 = vmatpush.msra.mxu0 %v1048
    %v1050 = vand.u32 %v484, 4294901760
    %1051 = vmatpush.msra.mxu0 %v1050
    %v1052 = vand.u32 %v483, 4294901760
    %1053 = vmatpush.msra.mxu0 %v1052
    %v1054 = vand.u32 %v482, 4294901760
    %1055 = vmatpush.msra.mxu0 %v1054
    %v1056 = vand.u32 %v492, 4294901760
    %1057 = vmatmul.f32.gmra.mxu0 %v1056
    %v1058 = vpop.f32.mrf.mxu0
    %v1059 = vadd.f32 %v986, %v1058
    %v1060 = vand.u32 %v495, 4294901760
    %1061 = vmatmul.f32.gmra.mxu0 %v1060
    %v1062 = vpop.f32.mrf.mxu0
    %v1063 = vadd.f32 %v990, %v1062
    %v1064 = vand.u32 %v498, 4294901760
    %1065 = vmatmul.f32.gmra.mxu0 %v1064
    %v1066 = vpop.f32.mrf.mxu0
    %v1067 = vadd.f32 %v994, %v1066
    %v1068 = vand.u32 %v501, 4294901760
    %1069 = vmatmul.f32.gmra.mxu0 %v1068
    %v1070 = vpop.f32.mrf.mxu0
    %v1071 = vadd.f32 %v998, %v1070
    %v1072 = vand.u32 %v504, 4294901760
    %1073 = vmatmul.f32.gmra.mxu0 %v1072
    %v1074 = vpop.f32.mrf.mxu0
    %v1075 = vadd.f32 %v1002, %v1074
    %v1076 = vand.u32 %v507, 4294901760
    %1077 = vmatmul.f32.gmra.mxu0 %v1076
    %v1078 = vpop.f32.mrf.mxu0
    %v1079 = vadd.f32 %v1006, %v1078
    %v1080 = vand.u32 %v510, 4294901760
    %1081 = vmatmul.f32.gmra.mxu0 %v1080
    %v1082 = vpop.f32.mrf.mxu0
    %v1083 = vadd.f32 %v1010, %v1082
    %v1084 = vand.u32 %v513, 4294901760
    %1085 = vmatmul.f32.gmra.mxu0 %v1084
    %v1086 = vpop.f32.mrf.mxu0
    %v1087 = vadd.f32 %v1014, %v1086
    %v1088 = vand.u32 %v516, 4294901760
    %1089 = vmatmul.f32.gmra.mxu0 %v1088
    %v1090 = vpop.f32.mrf.mxu0
    %v1091 = vadd.f32 %v1018, %v1090
    %v1092 = vand.u32 %v519, 4294901760
    %1093 = vmatmul.f32.gmra.mxu0 %v1092
    %v1094 = vpop.f32.mrf.mxu0
    %v1095 = vadd.f32 %v1022, %v1094
    %v1096 = vand.u32 %v522, 4294901760
    %1097 = vmatmul.f32.gmra.mxu0 %v1096
    %v1098 = vpop.f32.mrf.mxu0
    %v1099 = vadd.f32 %v1026, %v1098
    %v1100 = vand.u32 %v525, 4294901760
    %1101 = vmatmul.f32.gmra.mxu0 %v1100
    %v1102 = vpop.f32.mrf.mxu0
    %v1103 = vadd.f32 %v1030, %v1102
    %1104 = vdwg.mxu0
    %v1105 = vsub.f32 %v1059, 100.0
    %v1106 = vsub.f32 %v1063, 100.0
    %v1107 = vsub.f32 %v1067, 100.0
    %v1108 = vsub.f32 %v1071, 100.0
    %v1109 = vsub.f32 %v1075, 100.0
    %v1110 = vsub.f32 %v1079, 100.0
    %v1111 = vsub.f32 %v1083, 100.0
    %v1112 = vsub.f32 %v1087, 100.0
    %v1113 = vsub.f32 %v1091, 100.0
    %v1114 = vsub.f32 %v1095, 100.0
    %v1115 = vsub.f32 %v1099, 100.0
    %v1116 = vsub.f32 %v1103, 100.0
    %v1117 = vmax.f32 %v1105, 0.0
    %v1118 = vmax.f32 %v1106, 0.0
    %v1119 = vmax.f32 %v1107, 0.0
    %v1120 = vmax.f32 %v1108, 0.0
    %v1121 = vmax.f32 %v1109, 0.0
    %v1122 = vmax.f32 %v1110, 0.0
    %v1123 = vmax.f32 %v1111, 0.0
    %v1124 = vmax.f32 %v1112, 0.0
    %v1125 = vmax.f32 %v1113, 0.0
    %v1126 = vmax.f32 %v1114, 0.0
    %v1127 = vmax.f32 %v1115, 0.0
    %v1128 = vmax.f32 %v1116, 0.0
    %vm1129 = vcmask 261120
    %1130 = vst.msk [vmem:[#allocation2] sm:$0xff] %vm1129, %v1117
    %1131 = vst.msk [vmem:[#allocation2 + $0x8] sm:$0xff] %vm1129, %v1118
    %1132 = vst.msk [vmem:[#allocation2 + $0x10] sm:$0xff] %vm1129, %v1119
    %1133 = vst.msk [vmem:[#allocation2 + $0x18] sm:$0xff] %vm1129, %v1120
    %1134 = vst.msk [vmem:[#allocation2 + $0x20] sm:$0xff] %vm1129, %v1121
    %1135 = vst.msk [vmem:[#allocation2 + $0x28] sm:$0xff] %vm1129, %v1122
    %1136 = vst.msk [vmem:[#allocation2 + $0x30] sm:$0xff] %vm1129, %v1123
    %1137 = vst.msk [vmem:[#allocation2 + $0x38] sm:$0xff] %vm1129, %v1124
    %1138 = vst.msk [vmem:[#allocation2 + $0x40] sm:$0xff] %vm1129, %v1125
    %1139 = vst.msk [vmem:[#allocation2 + $0x48] sm:$0xff] %vm1129, %v1126
    %1140 = vst.msk [vmem:[#allocation2 + $0x50] sm:$0xff] %vm1129, %v1127
    %1141 = vst.msk [vmem:[#allocation2 + $0x58] sm:$0xff] %vm1129, %v1128
    // Predicated region
    $region10: #{tpu_custom_call.1} parent=1 // pred_check
      _
    $region11: #{tpu_custom_call.1} parent=1 // pred_check_branch
      %1143 = sbr.rel (0) target = $region13
    $region12: #{tpu_custom_call.1} parent=1 // pred_region
      %1145 = vsyncadd [#allocation3], 0
      %s1146 = sshll.u32 [#allocation2], 4
      %s1147 = int_to_ptr.vmem [resolvable:$true] %s1146
      %s1148 = sshll.u32 %s2, 4
      %s1149 = int_to_ptr.hbm [resolvable:$true] %s1148
      %1154 = dma.vmem_to_hbm [thread:$0]  %s1147, 1536, %s1149, [#allocation3], 128, 128, 8
    $region13: #{tpu_custom_call.1} parent=1 // pred_fallthru
      _
    // Predicated region
    $region14: #{tpu_custom_call.1} parent=1 // pred_check
      _
    $region15: #{tpu_custom_call.1} parent=1 // pred_check_branch
      %1156 = sbr.rel (0) target = $region17
    $region16: #{tpu_custom_call.1} parent=1 // pred_region
      %1158 = dma.done [#allocation3], 1536
    $region17: #{tpu_custom_call.1} parent=1 // pred_fallthru
      _
    %1159 = vsyncpa [#allocation3], 1

</llo_original>
